<compile_context>
chip_gen: v7x
topology: tpu7x:2x2x1
jax: 0.10.0
libtpu: 0.0.40
codegen_flags: <defaults>
</compile_context>

<pallas_src>
import functools

import jax
import jax.numpy as jnp
import numpy as np
from jax.experimental import pallas as pl
from jax.experimental.pallas import tpu as pltpu


# ---------------------------------------------------------------------------
# Generation-aware VMEM budgeting.
# ---------------------------------------------------------------------------
def _round_up(v, m):
    return ((v + m - 1) // m) * m


def _vmem_capacity_bytes():
    try:
        return int(pltpu.get_tpu_info().vmem_capacity_bytes)
    except Exception:
        return 64 << 20  # conservative (v7x-class) fallback


def _vmem_budget():
    """Returns (tile_budget_bytes, vmem_limit_cap_bytes, small_vmem_part)."""
    cap = _vmem_capacity_bytes()
    if cap >= (100 << 20):             # v5e / v6e: 128 MiB physical VMEM
        return 96 << 20, 112 << 20, False
    return 26 << 20, 48 << 20, True    # v7x-class: 64 MiB physical VMEM


def _fused_vmem_bytes(N, C, HW, hid, out_c, x_itemsize, mxu_itemsize):
    return (N * C * HW * x_itemsize            # x resident in VMEM
            + N * C * HW * 4                   # f32 upcast temp for the pool
            + N * C * 4 + N * C * mxu_itemsize  # pooled + MXU-dtype operand
            + C * hid * mxu_itemsize           # w1
            + hid * out_c * 4 + out_c * 4      # w2, b2
            + 3 * N * hid * 4                  # h, (h - mu), relu temps
            + 2 * N * out_c * 4)               # y + output buffer


def _choose_row_tile(N, C, HW, hid_p, x_itemsize, mxu_itemsize, hw_chunk, budget,
                     prefer_two_steps=False, max_rows=1024):
    per_row = (2 * C * HW * x_itemsize         # x tile, double-buffered by BlockSpec
               + C * hw_chunk * 4              # f32 upcast of one HW chunk
               + C * 4                         # f32 pool accumulator
               + C * mxu_itemsize              # MXU-dtype matmul operand
               + 2 * hid_p * 4)                # h tile, double-buffered
    fixed = 2 * C * hid_p * mxu_itemsize       # w1 (constant index, 2 pipeline bufs)
    avail = max(budget - fixed, per_row)
    tn = int(avail // per_row)
    tn = max(min(tn, N, max_rows), 1)
    if prefer_two_steps and N >= 16:
        # v7x: guarantee >= 2 grid steps so the "parallel" N axis shards over
        # both TensorCores (each TC issues its own HBM DMAs).
        tn = min(tn, _round_up(pl.cdiv(N, 2), 8))
    if tn < N:
        tn = min(max((tn // 8) * 8, 8), N)     # sublane-aligned output tile
    return tn


def _phase1_vmem_limit(tn, C, HW, hid_p, x_itemsize, mxu_itemsize, hw_chunk,
                       limit_cap):
    need = (2 * tn * C * HW * x_itemsize
            + tn * C * hw_chunk * 4
            + tn * C * 4
            + tn * C * mxu_itemsize
            + 2 * tn * hid_p * 4
            + 2 * C * hid_p * mxu_itemsize)
    return int(min(max(need + (6 << 20), 16 << 20), limit_cap))


# ---------------------------------------------------------------------------
# Fused fast path: pool + Linear1 + BN + ReLU + Linear2 + ReLU in one call.
# ---------------------------------------------------------------------------
def _fused_kernel(x_ref, w1_ref, w2_ref, b2_ref, o_ref, *, hw, mxu_dtype):
    # x: (N, C, HW) native dtype; w1: (C, hid) mxu dtype; w2: (hid, out) f32;
    # b2: (1, out) f32; o: (N, out) f32.
    pooled = jnp.sum(x_ref[...].astype(jnp.float32), axis=-1) * (1.0 / hw)  # (N, C)
    h = jnp.dot(pooled.astype(mxu_dtype), w1_ref[...],
                preferred_element_type=jnp.float32)                          # (N, hid)
    # BatchNorm1d(hid, momentum=0.001, affine=False): training-mode batch
    # statistics, biased variance, eps=1e-5.  Linear1's bias cancels exactly
    # in (h - mean_batch(h)), so it is never added.
    mu = jnp.mean(h, axis=0, keepdims=True)
    var = jnp.mean(jnp.square(h - mu), axis=0, keepdims=True)
    hn = jnp.maximum((h - mu) * jax.lax.rsqrt(var + 1e-5), 0.0)
    # Dropout(): identity (deterministic / eval mode).
    # TODO(synk): training-mode dropout (random mask + 1/(1-p) scaling) not applied.
    y = jnp.dot(hn, w2_ref[...], preferred_element_type=jnp.float32) + b2_ref[...]
    o_ref[...] = jnp.maximum(y, 0.0)


# ---------------------------------------------------------------------------
# Streamed phase 1: spatial average pool + Linear(C -> hid_p), gridded over N.
# ---------------------------------------------------------------------------
def _pool_linear1_kernel(x_ref, w1_ref, h_ref, *, hw, hw_chunk, mxu_dtype):
    # x: (tn, C, HW) native dtype; w1: (C, hid_p) mxu dtype; h: (tn, hid_p) f32.
    tn, c, _ = x_ref.shape
    acc = jnp.zeros((tn, c), dtype=jnp.float32)
    # Chunked f32 accumulation over HW: never materializes a full f32 copy of
    # the x tile (only the per-chunk temp that the VMEM budget accounts for).
    for j0 in range(0, hw, hw_chunk):
        j1 = min(j0 + hw_chunk, hw)
        acc = acc + jnp.sum(x_ref[:, :, j0:j1].astype(jnp.float32), axis=-1)
    pooled = acc * (1.0 / hw)                                            # (tn, C)
    h_ref[...] = jnp.dot(pooled.astype(mxu_dtype), w1_ref[...],
                         preferred_element_type=jnp.float32)


# ---------------------------------------------------------------------------
# Wrapper.
# ---------------------------------------------------------------------------
def nonlinear_neck_v0(x_nchw, w1, b1, w2, b2, *, row_tile=None):
    """NonLinearNeckV0 forward. x_nchw: (N, C, H, W). Returns [(N, out_channels)].

    b1 is accepted for interface parity with the torch module but cancels
    exactly in the affine-free batch-stat BatchNorm that follows Linear1.
    `row_tile` optionally forces the streamed two-phase path with a fixed
    N-row tile (testing / tuning hook).
    """
    del b1  # exactly cancels in (h - mean_batch(h)); see kernel comments.
    N, C, H, W = x_nchw.shape
    HW = H * W
    hid = w1.shape[1]
    out_c = w2.shape[1]

    x = x_nchw.reshape(N, C, HW)               # native NCHW layout, no transpose
    x_itemsize = jnp.dtype(x.dtype).itemsize
    mxu_dtype = jnp.bfloat16 if x.dtype == jnp.bfloat16 else jnp.float32
    mxu_itemsize = jnp.dtype(mxu_dtype).itemsize

    w1c = w1.astype(mxu_dtype)
    w2f = w2.astype(jnp.float32)
    b2f = b2.reshape(1, -1).astype(jnp.float32)

    budget, limit_cap, small_vmem = _vmem_budget()

    # ---- fused single-call fast path --------------------------------------
    fused_bytes = _fused_vmem_bytes(N, C, HW, hid, out_c, x_itemsize, mxu_itemsize)
    if row_tile is None and fused_bytes + (4 << 20) <= budget:
        vmem_limit = int(min(max(2 * fused_bytes, 8 << 20), limit_cap))
        vspec = pl.BlockSpec(memory_space=pltpu.MemorySpace.VMEM)
        out = pl.pallas_call(
            functools.partial(_fused_kernel, hw=HW, mxu_dtype=mxu_dtype),
            out_shape=jax.ShapeDtypeStruct((N, out_c), jnp.float32),
            in_specs=[vspec, vspec, vspec, vspec],
            out_specs=vspec,
            compiler_params=pltpu.CompilerParams(vmem_limit_bytes=vmem_limit),
        )(x, w1c, w2f, b2f)
        return [out]

    # ---- streamed two-phase path -------------------------------------------
    hid_p = _round_up(hid, 128)                # lane-dense phase-1 output stores
    # b1 is dropped, so zero-padded w1 columns give exactly-zero padded h columns.
    w1p = jnp.pad(w1c, ((0, 0), (0, hid_p - hid))) if hid_p != hid else w1c

    n_chunks = min(HW, 4 if x_itemsize < 4 else 2)
    hw_chunk = pl.cdiv(HW, n_chunks)

    tn = row_tile if row_tile is not None else _choose_row_tile(
        N, C, HW, hid_p, x_itemsize, mxu_itemsize, hw_chunk, budget,
        prefer_two_steps=small_vmem)
    grid = (pl.cdiv(N, tn),)
    vmem_limit = _phase1_vmem_limit(tn, C, HW, hid_p, x_itemsize, mxu_itemsize,
                                    hw_chunk, limit_cap)

    h_p = pl.pallas_call(
        functools.partial(_pool_linear1_kernel, hw=HW, hw_chunk=hw_chunk,
                          mxu_dtype=mxu_dtype),
        out_shape=jax.ShapeDtypeStruct((N, hid_p), jnp.float32),
        grid=grid,
        in_specs=[
            pl.BlockSpec((tn, C, HW), lambda i: (i, 0, 0)),
            pl.BlockSpec((C, hid_p), lambda i: (0, 0)),
        ],
        out_specs=pl.BlockSpec((tn, hid_p), lambda i: (i, 0)),
        compiler_params=pltpu.CompilerParams(
            dimension_semantics=("parallel",),
            vmem_limit_bytes=vmem_limit,
        ),
    )(x, w1p)

    # Phase 2: batch-stat BN + ReLU + Linear2 + ReLU on the tiny (N, hid) f32
    # intermediate.  Plain JAX per the perf review (XLA fuses this fine and we
    # save a second kernel launch).  Dropout(): identity.
    # TODO(synk): for extremely large N a tiled two-pass BN would be needed;
    # eval-mode BN (running stats) and dropout masks are not modeled.
    h = h_p[:, :hid]
    mu = jnp.mean(h, axis=0, keepdims=True)
    var = jnp.mean(jnp.square(h - mu), axis=0, keepdims=True)
    hn = jnp.maximum((h - mu) * jax.lax.rsqrt(var + 1e-5), 0.0)
    out = jnp.maximum(hn @ w2f + b2f, 0.0)
    return [out]


def reference(x_nchw, w1, b1, w2, b2):
    N, C, H, W = x_nchw.shape
    pooled = jnp.mean(x_nchw.reshape(N, C, H * W).astype(jnp.float32), axis=-1)
    h = pooled @ w1.astype(jnp.float32) + b1.astype(jnp.float32)
    mu = jnp.mean(h, axis=0, keepdims=True)
    var = jnp.mean(jnp.square(h - mu), axis=0, keepdims=True)
    h = jnp.maximum((h - mu) * jax.lax.rsqrt(var + 1e-5), 0.0)
    return jnp.maximum(h @ w2.astype(jnp.float32) + b2.astype(jnp.float32), 0.0)


if __name__ == "__main__":
    # Small shapes consistent with the module: batch=8, in_channels=16,
    # spatial 8x8, hid_channels=32, out_channels=16.
    N, C, H, W = 8, 16, 8, 8
    hid, out_c = 32, 16

    key = jax.random.PRNGKey(0)
    kx, k1, kb1, k2, kb2, kx2 = jax.random.split(key, 6)

    x = jax.random.normal(kx, (N, C, H, W), dtype=jnp.float32)
    # Linear weights ~ N(0, 0.01) per init_weights(); biases kept non-zero to
    # exercise the "b1 cancels in the affine-free batch-stat BN" optimization.
    w1 = 0.01 * jax.random.normal(k1, (C, hid), dtype=jnp.float32)
    b1 = 0.05 * jax.random.normal(kb1, (hid,), dtype=jnp.float32)
    w2 = 0.01 * jax.random.normal(k2, (hid, out_c), dtype=jnp.float32)
    b2 = 0.05 * jax.random.normal(kb2, (out_c,), dtype=jnp.float32)

    # 1) Fused single-call fast path (whole problem fits VMEM).
    (y,) = nonlinear_neck_v0(x, w1, b1, w2, b2)
    y = jax.block_until_ready(y)
    y_ref = jax.block_until_ready(reference(x, w1, b1, w2, b2))
    assert y.shape == (N, out_c)
    assert np.allclose(np.asarray(y), np.asarray(y_ref), rtol=1e-3, atol=2e-4), (
        float(np.max(np.abs(np.asarray(y) - np.asarray(y_ref)))))

    # 2) Streamed two-phase path, forced at small scale via an explicit row tile.
    N2 = 16
    x2 = jax.random.normal(kx2, (N2, C, H, W), dtype=jnp.float32)
    (y2,) = nonlinear_neck_v0(x2, w1, b1, w2, b2, row_tile=8)
    y2 = jax.block_until_ready(y2)
    y2_ref = jax.block_until_ready(reference(x2, w1, b1, w2, b2))
    assert y2.shape == (N2, out_c)
    assert np.allclose(np.asarray(y2), np.asarray(y2_ref), rtol=1e-3, atol=2e-4), (
        float(np.max(np.abs(np.asarray(y2) - np.asarray(y2_ref)))))

    print("KERNEL_OK")
</pallas_src>

<mosaic_0001>
module attributes {stable_mosaic.version = 11 : i64} {
  func.func @_fused_kernel(%arg0: memref<8x16x64xf32, #tpu.memory_space<vmem>>, %arg1: memref<16x32xf32, #tpu.memory_space<vmem>>, %arg2: memref<32x16xf32, #tpu.memory_space<vmem>>, %arg3: memref<1x16xf32, #tpu.memory_space<vmem>>, %arg4: memref<8x16xf32, #tpu.memory_space<vmem>>) attributes {dimension_semantics = [], scalar_prefetch = 0 : i64, scratch_operands = 0 : i64, tpu.core_type = #tpu.core_type<tc>} {
    %c0 = arith.constant 0 : index
    %c0_0 = arith.constant 0 : index
    %c0_1 = arith.constant 0 : index
    %0 = vector.load %arg0[%c0, %c0_0, %c0_1] : memref<8x16x64xf32, #tpu.memory_space<vmem>>, vector<8x16x64xf32>
    %cst = arith.constant dense<0.000000e+00> : vector<8x16xf32>
    %1 = vector.multi_reduction <add>, %0, %cst [2] : vector<8x16x64xf32> to vector<8x16xf32>
    %cst_2 = arith.constant 1.562500e-02 : f32
    %2 = vector.broadcast %cst_2 : f32 to vector<8x16xf32>
    %3 = arith.mulf %1, %2 : vector<8x16xf32>
    %c0_3 = arith.constant 0 : index
    %c0_4 = arith.constant 0 : index
    %4 = vector.load %arg1[%c0_3, %c0_4] : memref<16x32xf32, #tpu.memory_space<vmem>>, vector<16x32xf32>
    %cst_5 = arith.constant dense<0.000000e+00> : vector<8x32xf32>
    %5 = tpu.matmul %3, %4, %cst_5 {dimension_numbers = #tpu.dot_dimension_numbers<[1], [0], [0], [1], [0, 0, 1, 1], [], []>} : vector<8x16xf32>, vector<16x32xf32>, vector<8x32xf32> -> vector<8x32xf32>
    %cst_6 = arith.constant dense<0.000000e+00> : vector<32xf32>
    %6 = vector.multi_reduction <add>, %5, %cst_6 [0] : vector<8x32xf32> to vector<32xf32>
    %7 = vector.shape_cast %6 : vector<32xf32> to vector<1x32xf32>
    %cst_7 = arith.constant 8.000000e+00 : f32
    %8 = vector.broadcast %cst_7 : f32 to vector<1x32xf32>
    %9 = arith.divf %7, %8 : vector<1x32xf32>
    %10 = vector.broadcast %9 : vector<1x32xf32> to vector<8x32xf32>
    %11 = arith.subf %5, %10 : vector<8x32xf32>
    %12 = arith.mulf %11, %11 : vector<8x32xf32>
    %cst_8 = arith.constant dense<0.000000e+00> : vector<32xf32>
    %13 = vector.multi_reduction <add>, %12, %cst_8 [0] : vector<8x32xf32> to vector<32xf32>
    %14 = vector.shape_cast %13 : vector<32xf32> to vector<1x32xf32>
    %cst_9 = arith.constant 8.000000e+00 : f32
    %15 = vector.broadcast %cst_9 : f32 to vector<1x32xf32>
    %16 = arith.divf %14, %15 : vector<1x32xf32>
    %17 = vector.broadcast %9 : vector<1x32xf32> to vector<8x32xf32>
    %18 = arith.subf %5, %17 : vector<8x32xf32>
    %cst_10 = arith.constant 9.99999974E-6 : f32
    %19 = vector.broadcast %cst_10 : f32 to vector<1x32xf32>
    %20 = arith.addf %16, %19 : vector<1x32xf32>
    %21 = math.rsqrt %20 : vector<1x32xf32>
    %22 = vector.broadcast %21 : vector<1x32xf32> to vector<8x32xf32>
    %23 = arith.mulf %18, %22 : vector<8x32xf32>
    %cst_11 = arith.constant 0.000000e+00 : f32
    %24 = vector.broadcast %cst_11 : f32 to vector<8x32xf32>
    %25 = arith.maximumf %23, %24 : vector<8x32xf32>
    %c0_12 = arith.constant 0 : index
    %c0_13 = arith.constant 0 : index
    %26 = vector.load %arg2[%c0_12, %c0_13] : memref<32x16xf32, #tpu.memory_space<vmem>>, vector<32x16xf32>
    %cst_14 = arith.constant dense<0.000000e+00> : vector<8x16xf32>
    %27 = tpu.matmul %25, %26, %cst_14 {dimension_numbers = #tpu.dot_dimension_numbers<[1], [0], [0], [1], [0, 0, 1, 1], [], []>} : vector<8x32xf32>, vector<32x16xf32>, vector<8x16xf32> -> vector<8x16xf32>
    %c0_15 = arith.constant 0 : index
    %c0_16 = arith.constant 0 : index
    %28 = vector.load %arg3[%c0_15, %c0_16] : memref<1x16xf32, #tpu.memory_space<vmem>>, vector<1x16xf32>
    %29 = vector.broadcast %28 : vector<1x16xf32> to vector<8x16xf32>
    %30 = arith.addf %27, %29 : vector<8x16xf32>
    %cst_17 = arith.constant 0.000000e+00 : f32
    %31 = vector.broadcast %cst_17 : f32 to vector<8x16xf32>
    %32 = arith.maximumf %30, %31 : vector<8x16xf32>
    %c0_18 = arith.constant 0 : index
    %c0_19 = arith.constant 0 : index
    %33 = vector.load %arg4[%c0_18, %c0_19] : memref<8x16xf32, #tpu.memory_space<vmem>>, vector<8x16xf32>
    tpu.vector_store %arg4[%c0_18, %c0_19], %32 {strides = array<i32>} : memref<8x16xf32, #tpu.memory_space<vmem>>, vector<8x16xf32>,
    return
  }
}

</mosaic_0001>

<llo_original>
// kernel: tpu_custom_call.1
$region0: #{tpu_custom_call.1}
  #allocation0 [shape = 'u32[]', space=smem, size = 0x4, offset = 0x4, fixed_abs, tag = 'smem constant byte address 0x4 - core index']
  #allocation1 [shape = 'u32[144,128]{1,0:T(1,128)}', space=vmem, size = 0x12000, scoped, tag = 'internal scratch']
  %s0 = inlined_call_operand.hbm [shape: f32[8,16,64], index: 0, kind: input, shape index: {}]
  %s1 = inlined_call_operand.vmem [shape: f32[16,32], index: 1, kind: input, shape index: {}]
  %s2 = inlined_call_operand.vmem [shape: f32[32,16], index: 2, kind: input, shape index: {}]
  %s3 = inlined_call_operand.vmem [shape: f32[1,16], index: 3, kind: input, shape index: {}]
  %s4 = inlined_call_operand.hbm [shape: f32[8,16], index: 4, kind: output, shape index: {}]
  %s5 = sld [smem:[#allocation0]]
  $region30: #{tpu_custom_call.1} parent=0
    _
  %s7 = ssub.s32 1, %s5
  %s8 = scalar_select 0, %s7, %s5
  $region1: #{tpu_custom_call.1} parent=0
    #allocation2 [shape = 'u8[65536]{0}', space=vmem, size = 0x10000, scoped, tag = 'input window, operand 0, single buffered']
    #allocation3 [shape = 's32[1]{0}', space=sflag, size = 0x4, scoped, tag = 'scoped memory for tpu_custom_call.1']
    #allocation4 [shape = 's32[1]{0}', space=sflag, size = 0x4, scoped, tag = 'scoped memory for tpu_custom_call.1']
    #allocation5 [shape = 'u8[4096]{0}', space=vmem, size = 0x1000, scoped, tag = 'output window, operand 0, single buffered']
    %9 = vsyncpa [#allocation3], 0
    %10 = vsyncpa [#allocation4], 0
    // Predicated region
    $region2: #{tpu_custom_call.1} parent=1 // pred_check
      _
    $region3: #{tpu_custom_call.1} parent=1 // pred_check_branch
      %12 = sbr.rel (0) target = $region5
    $region4: #{tpu_custom_call.1} parent=1 // pred_region
      %s14 = ssub.s32 2048, 2048
      %15 = vsyncadd [#allocation3], %s14
      %s16 = sshll.u32 [#allocation2], 4
      %s17 = int_to_ptr.vmem [resolvable:$true] %s16
      %22 = dma.hbm_to_vmem [thread:$0]  %s0, 2048, %s17, [#allocation3], 128, 128, 8
    $region5: #{tpu_custom_call.1} parent=1 // pred_fallthru
      _
    // Predicated region
    $region6: #{tpu_custom_call.1} parent=1 // pred_check
      _
    $region7: #{tpu_custom_call.1} parent=1 // pred_check_branch
      %24 = sbr.rel (0) target = $region9
    $region8: #{tpu_custom_call.1} parent=1 // pred_region
      _
    $region9: #{tpu_custom_call.1} parent=1 // pred_fallthru
      _
    // Predicated region
    $region10: #{tpu_custom_call.1} parent=1 // pred_check
      _
    $region11: #{tpu_custom_call.1} parent=1 // pred_check_branch
      %26 = sbr.rel (0) target = $region13
    $region12: #{tpu_custom_call.1} parent=1 // pred_region
      _
    $region13: #{tpu_custom_call.1} parent=1 // pred_fallthru
      _
    // Predicated region
    $region14: #{tpu_custom_call.1} parent=1 // pred_check
      _
    $region15: #{tpu_custom_call.1} parent=1 // pred_check_branch
      %28 = sbr.rel (0) target = $region17
    $region16: #{tpu_custom_call.1} parent=1 // pred_region
      _
    $region17: #{tpu_custom_call.1} parent=1 // pred_fallthru
      _
    // Predicated region
    $region18: #{tpu_custom_call.1} parent=1 // pred_check
      _
    $region19: #{tpu_custom_call.1} parent=1 // pred_check_branch
      %30 = sbr.rel (0) target = $region21
    $region20: #{tpu_custom_call.1} parent=1 // pred_region
      %31 = dma.done [#allocation3], 2048
    $region21: #{tpu_custom_call.1} parent=1 // pred_fallthru
      _
    %v32 = vld [vmem:[#allocation2] sm:$0xff]
    %v33 = vld [vmem:[#allocation2 + $0x8] sm:$0xff]
    %v34 = vld [vmem:[#allocation2 + $0x10] sm:$0xff]
    %v35 = vld [vmem:[#allocation2 + $0x18] sm:$0xff]
    %v36 = vld [vmem:[#allocation2 + $0x20] sm:$0xff]
    %v37 = vld [vmem:[#allocation2 + $0x28] sm:$0xff]
    %v38 = vld [vmem:[#allocation2 + $0x30] sm:$0xff]
    %v39 = vld [vmem:[#allocation2 + $0x38] sm:$0xff]
    %v40 = vld [vmem:[#allocation2 + $0x40] sm:$0xff]
    %v41 = vld [vmem:[#allocation2 + $0x48] sm:$0xff]
    %v42 = vld [vmem:[#allocation2 + $0x50] sm:$0xff]
    %v43 = vld [vmem:[#allocation2 + $0x58] sm:$0xff]
    %v44 = vld [vmem:[#allocation2 + $0x60] sm:$0xff]
    %v45 = vld [vmem:[#allocation2 + $0x68] sm:$0xff]
    %v46 = vld [vmem:[#allocation2 + $0x70] sm:$0xff]
    %v47 = vld [vmem:[#allocation2 + $0x78] sm:$0xff]
    %vm48 = vcmask 523264
    %v49 = vsel %vm48, %v32, 0.0
    %50 = vadd.xlane.f32.xlu0 %v49
    %v51 = vpop.xlane.xlu0 %50
    %v52 = vsel %vm48, %v33, 0.0
    %53 = vadd.xlane.f32.xlu0 %v52
    %v54 = vpop.xlane.xlu0 %53
    %v55 = vsel %vm48, %v34, 0.0
    %56 = vadd.xlane.f32.xlu0 %v55
    %v57 = vpop.xlane.xlu0 %56
    %v58 = vsel %vm48, %v35, 0.0
    %59 = vadd.xlane.f32.xlu0 %v58
    %v60 = vpop.xlane.xlu0 %59
    %v61 = vsel %vm48, %v36, 0.0
    %62 = vadd.xlane.f32.xlu0 %v61
    %v63 = vpop.xlane.xlu0 %62
    %v64 = vsel %vm48, %v37, 0.0
    %65 = vadd.xlane.f32.xlu0 %v64
    %v66 = vpop.xlane.xlu0 %65
    %v67 = vsel %vm48, %v38, 0.0
    %68 = vadd.xlane.f32.xlu0 %v67
    %v69 = vpop.xlane.xlu0 %68
    %v70 = vsel %vm48, %v39, 0.0
    %71 = vadd.xlane.f32.xlu0 %v70
    %v72 = vpop.xlane.xlu0 %71
    %v73 = vsel %vm48, %v40, 0.0
    %74 = vadd.xlane.f32.xlu0 %v73
    %v75 = vpop.xlane.xlu0 %74
    %v76 = vsel %vm48, %v41, 0.0
    %77 = vadd.xlane.f32.xlu0 %v76
    %v78 = vpop.xlane.xlu0 %77
    %v79 = vsel %vm48, %v42, 0.0
    %80 = vadd.xlane.f32.xlu0 %v79
    %v81 = vpop.xlane.xlu0 %80
    %v82 = vsel %vm48, %v43, 0.0
    %83 = vadd.xlane.f32.xlu0 %v82
    %v84 = vpop.xlane.xlu0 %83
    %v85 = vsel %vm48, %v44, 0.0
    %86 = vadd.xlane.f32.xlu0 %v85
    %v87 = vpop.xlane.xlu0 %86
    %v88 = vsel %vm48, %v45, 0.0
    %89 = vadd.xlane.f32.xlu0 %v88
    %v90 = vpop.xlane.xlu0 %89
    %v91 = vsel %vm48, %v46, 0.0
    %92 = vadd.xlane.f32.xlu0 %v91
    %v93 = vpop.xlane.xlu0 %92
    %v94 = vsel %vm48, %v47, 0.0
    %95 = vadd.xlane.f32.xlu0 %v94
    %v96 = vpop.xlane.xlu0 %95
    %v97 = vmul.f32 %v51, 0.015625
    %v98 = vmul.f32 %v54, 0.015625
    %v99 = vmul.f32 %v57, 0.015625
    %v100 = vmul.f32 %v60, 0.015625
    %v101 = vmul.f32 %v63, 0.015625
    %v102 = vmul.f32 %v66, 0.015625
    %v103 = vmul.f32 %v69, 0.015625
    %v104 = vmul.f32 %v72, 0.015625
    %v105 = vmul.f32 %v75, 0.015625
    %v106 = vmul.f32 %v78, 0.015625
    %v107 = vmul.f32 %v81, 0.015625
    %v108 = vmul.f32 %v84, 0.015625
    %v109 = vmul.f32 %v87, 0.015625
    %v110 = vmul.f32 %v90, 0.015625
    %v111 = vmul.f32 %v93, 0.015625
    %v112 = vmul.f32 %v96, 0.015625
    %v113 = vld [vmem:[%s1] sm:$0xff]
    %v114 = vld [vmem:[%s1 + $0x8] sm:$0xff]
    %v131 = vlaneseq
    %v132 = vand.u32 %v131, 127
    %v133 = vlaneseq
    %v134 = vshrl.u32 %v133, 7
    %v135 = vsub.s32 %v132, %v134
    %v136 = vrot.slane %v97, %v135
    %v137 = vadd.s32 %v132, 4294967288
    %v138 = vlaneseq
    %v139 = vshrl.u32 %v138, 7
    %v140 = vsub.s32 %v137, %v139
    %v141 = vrot.slane %v98, %v140
    %vm142 = vcmask 130112
    %v143 = vsel %vm142, %v141, %v136
    %v144 = vlaneseq
    %v145 = vshrl.u32 %v144, 7
    %v146 = vsub.s32 %v132, %v145
    %v147 = vrot.slane %v99, %v146
    %v148 = vlaneseq
    %v149 = vshrl.u32 %v148, 7
    %v150 = vsub.s32 %v137, %v149
    %v151 = vrot.slane %v100, %v150
    %v152 = vsel %vm142, %v151, %v147
    %v153 = vlaneseq
    %v154 = vshrl.u32 %v153, 7
    %v155 = vsub.s32 %v132, %v154
    %v156 = vrot.slane %v101, %v155
    %v157 = vlaneseq
    %v158 = vshrl.u32 %v157, 7
    %v159 = vsub.s32 %v137, %v158
    %v160 = vrot.slane %v102, %v159
    %v161 = vsel %vm142, %v160, %v156
    %v162 = vlaneseq
    %v163 = vshrl.u32 %v162, 7
    %v164 = vsub.s32 %v132, %v163
    %v165 = vrot.slane %v103, %v164
    %v166 = vlaneseq
    %v167 = vshrl.u32 %v166, 7
    %v168 = vsub.s32 %v137, %v167
    %v169 = vrot.slane %v104, %v168
    %v170 = vsel %vm142, %v169, %v165
    %v171 = vlaneseq
    %v172 = vshrl.u32 %v171, 7
    %v173 = vsub.s32 %v132, %v172
    %v174 = vrot.slane %v105, %v173
    %v175 = vlaneseq
    %v176 = vshrl.u32 %v175, 7
    %v177 = vsub.s32 %v137, %v176
    %v178 = vrot.slane %v106, %v177
    %v179 = vsel %vm142, %v178, %v174
    %v180 = vlaneseq
    %v181 = vshrl.u32 %v180, 7
    %v182 = vsub.s32 %v132, %v181
    %v183 = vrot.slane %v107, %v182
    %v184 = vlaneseq
    %v185 = vshrl.u32 %v184, 7
    %v186 = vsub.s32 %v137, %v185
    %v187 = vrot.slane %v108, %v186
    %v188 = vsel %vm142, %v187, %v183
    %v189 = vlaneseq
    %v190 = vshrl.u32 %v189, 7
    %v191 = vsub.s32 %v132, %v190
    %v192 = vrot.slane %v109, %v191
    %v193 = vlaneseq
    %v194 = vshrl.u32 %v193, 7
    %v195 = vsub.s32 %v137, %v194
    %v196 = vrot.slane %v110, %v195
    %v197 = vsel %vm142, %v196, %v192
    %v198 = vlaneseq
    %v199 = vshrl.u32 %v198, 7
    %v200 = vsub.s32 %v132, %v199
    %v201 = vrot.slane %v111, %v200
    %v202 = vlaneseq
    %v203 = vshrl.u32 %v202, 7
    %v204 = vsub.s32 %v137, %v203
    %v205 = vrot.slane %v112, %v204
    %v206 = vsel %vm142, %v205, %v201
    %vm207 = vcmask 1041409
    %v208 = vsel %vm207, %v152, %v143
    %vm209 = vcmask 1042434
    %v210 = vsel %vm209, %v161, %v208
    %vm211 = vcmask 1043459
    %v212 = vsel %vm211, %v170, %v210
    %vm213 = vcmask 1044484
    %v214 = vsel %vm213, %v179, %v212
    %vm215 = vcmask 1045509
    %v216 = vsel %vm215, %v188, %v214
    %vm217 = vcmask 1046534
    %v218 = vsel %vm217, %v197, %v216
    %vm219 = vcmask 1047559
    %v220 = vsel %vm219, %v206, %v218
    %vm221 = vcmask 130048
    %v222 = vsel %vm221, %v220, 0
    %224 = vmatprep.subr.mxu0 0.0
    %225 = vmatpush1.msra.mxu0 %v113
    %226 = vmatprep.subr.mxu0 0.0
    %227 = vmatpush1.msra.mxu0 %v114
    %228 = vmatprep.subr.mxu0 0.0
    %229 = vmatpush1.msra.mxu0 0.0
    %230 = vmatprep.subr.mxu0 0.0
    %231 = vmatpush1.msra.mxu0 0.0
    %232 = vmatprep.subr.mxu0 0.0
    %233 = vmatpush1.msra.mxu0 0.0
    %234 = vmatprep.subr.mxu0 0.0
    %235 = vmatpush1.msra.mxu0 0.0
    %236 = vmatprep.subr.mxu0 0.0
    %237 = vmatpush1.msra.mxu0 0.0
    %238 = vmatprep.subr.mxu0 0.0
    %239 = vmatpush1.msra.mxu0 0.0
    %240 = vmatprep.subr.mxu0 0.0
    %241 = vmatpush1.msra.mxu0 0.0
    %242 = vmatprep.subr.mxu0 0.0
    %243 = vmatpush1.msra.mxu0 0.0
    %244 = vmatprep.subr.mxu0 0.0
    %245 = vmatpush1.msra.mxu0 0.0
    %246 = vmatprep.subr.mxu0 0.0
    %247 = vmatpush1.msra.mxu0 0.0
    %248 = vmatprep.subr.mxu0 0.0
    %249 = vmatpush1.msra.mxu0 0.0
    %250 = vmatprep.subr.mxu0 0.0
    %251 = vmatpush1.msra.mxu0 0.0
    %252 = vmatprep.subr.mxu0 0.0
    %253 = vmatpush1.msra.mxu0 0.0
    %254 = vmatprep.subr.mxu0 0.0
    %255 = vmatpush1.msra.mxu0 0.0
    %256 = vmatprep.subr.mxu0 0.0
    %257 = vmatpush1.msra.mxu0 0.0
    %258 = vmatprep.subr.mxu0 0.0
    %259 = vmatpush1.msra.mxu0 0.0
    %260 = vmatprep.subr.mxu0 0.0
    %261 = vmatpush1.msra.mxu0 0.0
    %262 = vmatprep.subr.mxu0 0.0
    %263 = vmatpush1.msra.mxu0 0.0
    %264 = vmatprep.subr.mxu0 0.0
    %265 = vmatpush1.msra.mxu0 0.0
    %266 = vmatprep.subr.mxu0 0.0
    %267 = vmatpush1.msra.mxu0 0.0
    %268 = vmatprep.subr.mxu0 0.0
    %269 = vmatpush1.msra.mxu0 0.0
    %270 = vmatprep.subr.mxu0 0.0
    %271 = vmatpush1.msra.mxu0 0.0
    %272 = vmatprep.subr.mxu0 0.0
    %273 = vmatpush1.msra.mxu0 0.0
    %274 = vmatprep.subr.mxu0 0.0
    %275 = vmatpush1.msra.mxu0 0.0
    %276 = vmatprep.subr.mxu0 0.0
    %277 = vmatpush1.msra.mxu0 0.0
    %278 = vmatprep.subr.mxu0 0.0
    %279 = vmatpush1.msra.mxu0 0.0
    %280 = vmatprep.subr.mxu0 0.0
    %281 = vmatpush1.msra.mxu0 0.0
    %282 = vmatprep.subr.mxu0 0.0
    %283 = vmatpush1.msra.mxu0 0.0
    %284 = vmatprep.subr.mxu0 0.0
    %285 = vmatpush1.msra.mxu0 0.0
    %286 = vmatprep.subr.mxu0 0.0
    %287 = vmatpush1.msra.mxu0 0.0
    %288 = vmatprep.mubr.f32.mxu0 0.0
    %289 = vmatmul.mubr.f32.gmra.mrb[0].mxu0 %v222
    %v290 = vpop.f32.mrb[0].mxu0
    %v291 = vadd.f32 0.0, %v290
    %v292 = vpop.f32.mrb[0].mxu0
    %293 = vdwg.mxu0
    %vm294 = vcmask 261120
    %v295 = vsel %vm294, %v291, 0.0
    %v296 = vrot.slane %v295, 4
    %v297 = vadd.f32 %v295, %v296
    %v298 = vrot.slane %v297, 2
    %v299 = vadd.f32 %v297, %v298
    %v300 = vrot.slane %v299, 1
    %v301 = vadd.f32 %v299, %v300
    %v302 = vrcp.pop 8.0
    %v303 = vmul.f32 %v301, %v302
    %v304 = vsub.f32 %v291, %v303
    %v305 = vmul.f32 %v304, %v304
    %v306 = vsel %vm294, %v305, 0.0
    %v307 = vrot.slane %v306, 4
    %v308 = vadd.f32 %v306, %v307
    %v309 = vrot.slane %v308, 2
    %v310 = vadd.f32 %v308, %v309
    %v311 = vrot.slane %v310, 1
    %v312 = vadd.f32 %v310, %v311
    %v313 = vmul.f32 %v312, %v302
    %v314 = vadd.f32 %v313, 1e-05
    %v315 = vrsqrt.pop %v314
    %v316 = vmul.f32 %v304, %v315
    %v317 = vmax.f32 %v316, 0.0
    %v318 = vld [vmem:[%s2] sm:$0xff]
    %v319 = vld [vmem:[%s2 + $0x8] sm:$0xff]
    %v320 = vld [vmem:[%s2 + $0x10] sm:$0xff]
    %v321 = vld [vmem:[%s2 + $0x18] sm:$0xff]
    %v322 = vld [vmem:[%s3] sm:$0x1]
    %v324 = vlaneseq
    %v325 = vshrl.u32 %v324, 7
    %v326 = vsub.s32 0, %v325
    %v327 = vrot.slane %v322, %v326
    %v330 = vsel %vm294, %v317, 0
    %332 = vmatprep.subr.mxu0 0.0
    %333 = vmatpush1.msra.mxu0 %v318
    %334 = vmatprep.subr.mxu0 0.0
    %335 = vmatpush1.msra.mxu0 %v319
    %336 = vmatprep.subr.mxu0 0.0
    %337 = vmatpush1.msra.mxu0 %v320
    %338 = vmatprep.subr.mxu0 0.0
    %339 = vmatpush1.msra.mxu0 %v321
    %340 = vmatprep.subr.mxu0 0.0
    %341 = vmatpush1.msra.mxu0 0.0
    %342 = vmatprep.subr.mxu0 0.0
    %343 = vmatpush1.msra.mxu0 0.0
    %344 = vmatprep.subr.mxu0 0.0
    %345 = vmatpush1.msra.mxu0 0.0
    %346 = vmatprep.subr.mxu0 0.0
    %347 = vmatpush1.msra.mxu0 0.0
    %348 = vmatprep.subr.mxu0 0.0
    %349 = vmatpush1.msra.mxu0 0.0
    %350 = vmatprep.subr.mxu0 0.0
    %351 = vmatpush1.msra.mxu0 0.0
    %352 = vmatprep.subr.mxu0 0.0
    %353 = vmatpush1.msra.mxu0 0.0
    %354 = vmatprep.subr.mxu0 0.0
    %355 = vmatpush1.msra.mxu0 0.0
    %356 = vmatprep.subr.mxu0 0.0
    %357 = vmatpush1.msra.mxu0 0.0
    %358 = vmatprep.subr.mxu0 0.0
    %359 = vmatpush1.msra.mxu0 0.0
    %360 = vmatprep.subr.mxu0 0.0
    %361 = vmatpush1.msra.mxu0 0.0
    %362 = vmatprep.subr.mxu0 0.0
    %363 = vmatpush1.msra.mxu0 0.0
    %364 = vmatprep.subr.mxu0 0.0
    %365 = vmatpush1.msra.mxu0 0.0
    %366 = vmatprep.subr.mxu0 0.0
    %367 = vmatpush1.msra.mxu0 0.0
    %368 = vmatprep.subr.mxu0 0.0
    %369 = vmatpush1.msra.mxu0 0.0
    %370 = vmatprep.subr.mxu0 0.0
    %371 = vmatpush1.msra.mxu0 0.0
    %372 = vmatprep.subr.mxu0 0.0
    %373 = vmatpush1.msra.mxu0 0.0
    %374 = vmatprep.subr.mxu0 0.0
    %375 = vmatpush1.msra.mxu0 0.0
    %376 = vmatprep.subr.mxu0 0.0
    %377 = vmatpush1.msra.mxu0 0.0
    %378 = vmatprep.subr.mxu0 0.0
    %379 = vmatpush1.msra.mxu0 0.0
    %380 = vmatprep.subr.mxu0 0.0
    %381 = vmatpush1.msra.mxu0 0.0
    %382 = vmatprep.subr.mxu0 0.0
    %383 = vmatpush1.msra.mxu0 0.0
    %384 = vmatprep.subr.mxu0 0.0
    %385 = vmatpush1.msra.mxu0 0.0
    %386 = vmatprep.subr.mxu0 0.0
    %387 = vmatpush1.msra.mxu0 0.0
    %388 = vmatprep.subr.mxu0 0.0
    %389 = vmatpush1.msra.mxu0 0.0
    %390 = vmatprep.subr.mxu0 0.0
    %391 = vmatpush1.msra.mxu0 0.0
    %392 = vmatprep.subr.mxu0 0.0
    %393 = vmatpush1.msra.mxu0 0.0
    %394 = vmatprep.subr.mxu0 0.0
    %395 = vmatpush1.msra.mxu0 0.0
    %396 = vmatprep.mubr.f32.mxu0 0.0
    %397 = vmatmul.mubr.f32.gmra.mrb[0].mxu0 %v330
    %v398 = vpop.f32.mrb[0].mxu0
    %v399 = vadd.f32 %v327, %v398
    %v400 = vpop.f32.mrb[0].mxu0
    %401 = vdwg.mxu0
    %v402 = vmax.f32 %v399, 0.0
    %403 = vst.msk [vmem:[#allocation5] sm:$0xff] %vm221, %v402
    // Predicated region
    $region22: #{tpu_custom_call.1} parent=1 // pred_check
      _
    $region23: #{tpu_custom_call.1} parent=1 // pred_check_branch
      %405 = sbr.rel (0) target = $region25
    $region24: #{tpu_custom_call.1} parent=1 // pred_region
      %s407 = ssub.s32 128, 128
      %408 = vsyncadd [#allocation4], %s407
      %s410 = sshll.u32 [#allocation5], 4
      %s411 = int_to_ptr.vmem [resolvable:$true] %s410
      %413 = dma.vmem_to_hbm [thread:$0]  %s411, 128, %s4, [#allocation4]
    $region25: #{tpu_custom_call.1} parent=1 // pred_fallthru
      _
    // Predicated region
    $region26: #{tpu_custom_call.1} parent=1 // pred_check
      _
    $region27: #{tpu_custom_call.1} parent=1 // pred_check_branch
      %415 = sbr.rel (0) target = $region29
    $region28: #{tpu_custom_call.1} parent=1 // pred_region
      %416 = dma.done [#allocation4], 128
    $region29: #{tpu_custom_call.1} parent=1 // pred_fallthru
      _
    %417 = vsyncpa [#allocation3], 1
    %418 = vsyncpa [#allocation4], 1

</llo_original>
